<compile_context>
chip_gen: v7x
topology: tpu7x:2x2x1
jax: 0.10.0
libtpu: 0.0.40
codegen_flags: <defaults>
</compile_context>

<pallas_src>
import functools

import jax
import jax.numpy as jnp
from jax.experimental import pallas as pl
from jax.experimental.pallas import tpu as pltpu

LANES = 128      # vreg lane count (last dim)
SUBLANES = 8     # f32 sublane count (second-to-last dim of one vreg)

# (4096, 128) f32 block = 2 MiB; two inputs x two pipeline buffers = 8 MiB of
# scoped VMEM plus a 4 KiB accumulator -> fits the scoped-VMEM defaults on
# v5e (16 MiB), v6e (32 MiB) and v7x (32 MiB scoped / 64 MiB physical).
MAX_ROWS_PER_BLOCK = 4096

# Leading "parallel" grid axis: on v7x (2 TensorCores/chip) the two halves of
# the row-block range stream on separate cores; on v5e/v6e (1 TC) it is just a
# sequential outer loop with the same total number of steps.
NUM_CORE_SPLITS = 2

# Below this element count the whole call is dispatch overhead; let XLA fuse a
# plain abs/sub/mean instead of launching the Pallas kernel.
MIN_PALLAS_ELEMS = 64 * 1024


def _l1_partial_kernel(p_ref, g_ref, out_ref, acc_ref, *, tm, bps, rows_valid,
                       inv_n, any_mask):
    c = pl.program_id(0)   # core-split index              ("parallel")
    k = pl.program_id(1)   # row-block index within split  ("arbitrary")

    @pl.when(k == 0)
    def _init():
        acc_ref[...] = jnp.zeros_like(acc_ref)

    def accumulate(masked):
        diff = jnp.abs(p_ref[...].astype(jnp.float32)
                       - g_ref[...].astype(jnp.float32))
        if masked:
            # Block (possibly) extends past the array end: zero the rows whose
            # global row index is out of range (select, so NaN/Inf garbage in
            # the padded tail cannot leak into the sum).
            base_row = (c * bps + k) * tm
            row_ids = jax.lax.broadcasted_iota(jnp.int32, (tm, LANES), 0) + base_row
            diff = jnp.where(row_ids < rows_valid, diff, jnp.float32(0.0))
        # Fold the (tm, 128) block onto a single (8, 128) vreg with pure VPU
        # adds; keeps the per-step critical path to 2 vld + VPU work (no acc
        # store per chunk, no per-step cross-lane reduce).
        acc_ref[...] += jnp.sum(
            diff.reshape(tm // SUBLANES, SUBLANES, LANES), axis=0)

    if any_mask:
        past_end = (c * bps + k + 1) * tm > rows_valid
        @pl.when(jnp.logical_not(past_end))
        def _fast():
            accumulate(False)

        @pl.when(past_end)
        def _masked():
            accumulate(True)
    else:
        accumulate(False)

    @pl.when(k == bps - 1)
    def _finalize():
        # Fold the mean's 1/n into the kernel; the wrapper only adds the
        # (at most NUM_CORE_SPLITS) per-split partial vregs.
        out_ref[...] = acc_ref[...] * jnp.float32(inv_n)


def _pallas_l1_mean(pred, gt, *, min_pallas_elems=MIN_PALLAS_ELEMS):
    assert pred.shape == gt.shape, "pred/gt must have the same shape"
    n_elems = pred.size
    if n_elems == 0:
        return jnp.float32(jnp.nan)  # matches torch mean-of-empty

    rows = n_elems // LANES
    if n_elems < min_pallas_elems or n_elems % LANES != 0 or rows < SUBLANES:
        # Tiny / irregular inputs: dispatch overhead dominates (or the data is
        # not lane-dense without an HBM-copying pad); one small XLA fusion.
        # TODO(synk): an in-kernel flat-index lane mask could also cover the
        # rare "large but n % 128 != 0" case without HBM pad copies.
        return jnp.mean(jnp.abs(pred.astype(jnp.float32) - gt.astype(jnp.float32)))

    # Lane-dense (rows, 128) view; free because n % 128 == 0. Inputs keep
    # their dtype (bf16 stays bf16 through the DMA; upcast happens in-kernel).
    p2 = pred.reshape(rows, LANES)
    g2 = gt.reshape(rows, LANES)

    # Row tile: a multiple of 8 (so the in-kernel vreg fold is a pure view),
    # capped so the double-buffered input blocks stay inside scoped VMEM.
    tm = min(MAX_ROWS_PER_BLOCK, (rows // SUBLANES) * SUBLANES)
    num_blocks = pl.cdiv(rows, tm)
    num_splits = NUM_CORE_SPLITS if num_blocks >= NUM_CORE_SPLITS else 1
    bps = pl.cdiv(num_blocks, num_splits)        # blocks per split
    any_mask = (num_splits * bps * tm) != rows   # partial / padding steps exist

    def in_index_map(c, k):
        # Clamp so the DMA never targets a block fully past the array end;
        # such padding steps are fully zero-masked in-kernel via the
        # (unclamped) logical block index.
        return (jnp.minimum(c * bps + k, num_blocks - 1), 0)

    kernel = functools.partial(
        _l1_partial_kernel, tm=tm, bps=bps, rows_valid=rows,
        inv_n=1.0 / float(n_elems), any_mask=any_mask)

    partials = pl.pallas_call(
        kernel,
        out_shape=jax.ShapeDtypeStruct((num_splits, SUBLANES, LANES), jnp.float32),
        grid_spec=pltpu.PrefetchScalarGridSpec(
            num_scalar_prefetch=0,
            grid=(num_splits, bps),
            in_specs=[
                pl.BlockSpec((tm, LANES), in_index_map),
                pl.BlockSpec((tm, LANES), in_index_map),
            ],
            out_specs=pl.BlockSpec((None, SUBLANES, LANES), lambda c, k: (c, 0, 0)),
            scratch_shapes=[pltpu.VMEM((SUBLANES, LANES), jnp.float32)],
        ),
        compiler_params=pltpu.CompilerParams(
            # Core splits are independent (megacore); row blocks within a
            # split share one resident accumulator -> sequential.
            dimension_semantics=("parallel", "arbitrary"),
        ),
    )(p2, g2)

    # Partials already carry the 1/n factor; combining <= 2 vregs is one tiny op.
    return jnp.sum(partials)


class L1Loss:
    """JAX/Pallas port of the PyTorch L1Loss wrapper module (reduction='mean')."""

    def __init__(self, weight=1.0, log_key="l1", **kwargs):
        self.weight = weight
        self.log_key = log_key
        self.pred_key = kwargs["pred_key"]
        self.target_key = kwargs["target_key"]

    def __call__(self, pred, gt):
        loss = _pallas_l1_mean(pred[self.pred_key], gt[self.target_key])
        loss_dict = {self.log_key: loss}
        scaled = loss if self.weight == 1.0 else loss * jnp.float32(self.weight)
        return (scaled, loss_dict)


if __name__ == "__main__":
    key = jax.random.PRNGKey(0)
    k1, k2, k3, k4 = jax.random.split(key, 4)

    # --- Primary module-consistent shape (2, 4, 16, 16). ---
    shape = (2, 4, 16, 16)
    pred_img = jax.random.normal(k1, shape, dtype=jnp.float32)
    gt_img = jax.random.normal(k2, shape, dtype=jnp.float32)

    module = L1Loss(weight=2.0, log_key="l1", pred_key="rgb", target_key="rgb")
    scaled_loss, loss_dict = module({"rgb": pred_img}, {"rgb": gt_img})
    scaled_loss = jax.block_until_ready(scaled_loss)

    ref = jnp.mean(jnp.abs(pred_img - gt_img))
    assert jnp.allclose(loss_dict["l1"], ref, rtol=1e-6, atol=1e-6), (loss_dict["l1"], ref)
    assert jnp.allclose(scaled_loss, 2.0 * ref, rtol=1e-6, atol=1e-6), (scaled_loss, ref)

    # --- Force the Pallas kernel on the same small shape (single block, single split). ---
    got_small = jax.block_until_ready(
        _pallas_l1_mean(pred_img, gt_img, min_pallas_elems=0))
    assert jnp.allclose(got_small, ref, rtol=1e-6, atol=1e-6), (got_small, ref)

    # --- Multi-block path: 10240 rows -> 3 blocks of 4096 on a (2, 2) grid
    #     (partial last block + one fully-masked padding step + 2-way split). ---
    big_shape = (2, 4, 512, 320)
    pa = jax.random.normal(k3, big_shape, dtype=jnp.float32)
    pb = jax.random.normal(k4, big_shape, dtype=jnp.float32)
    got_big = jax.block_until_ready(_pallas_l1_mean(pa, pb))
    ref_big = jnp.mean(jnp.abs(pa - pb))
    assert jnp.allclose(got_big, ref_big, rtol=1e-5, atol=1e-6), (got_big, ref_big)

    # --- bf16 inputs stay bf16 through the DMA (upcast happens in-kernel). ---
    pa16, pb16 = pa.astype(jnp.bfloat16), pb.astype(jnp.bfloat16)
    got_bf16 = jax.block_until_ready(_pallas_l1_mean(pa16, pb16))
    ref_bf16 = jnp.mean(jnp.abs(pa16.astype(jnp.float32) - pb16.astype(jnp.float32)))
    assert jnp.allclose(got_bf16, ref_bf16, rtol=1e-5, atol=1e-6), (got_bf16, ref_bf16)

    # --- Odd element count (n % 128 != 0): fused jnp fallback path. ---
    pc = jax.random.normal(jax.random.PRNGKey(1), (3, 5, 7), dtype=jnp.float32)
    pd = jax.random.normal(jax.random.PRNGKey(2), (3, 5, 7), dtype=jnp.float32)
    got_odd = jax.block_until_ready(_pallas_l1_mean(pc, pd))
    ref_odd = jnp.mean(jnp.abs(pc - pd))
    assert jnp.allclose(got_odd, ref_odd, rtol=1e-6, atol=1e-6), (got_odd, ref_odd)

    print("KERNEL_OK")
</pallas_src>

<mosaic_0001>
module attributes {stable_mosaic.version = 11 : i64} {
  func.func @_l1_partial_kernel(%arg0: i32, %arg1: i32, %arg2: memref<16x128xf32, #tpu.memory_space<vmem>>, %arg3: memref<16x128xf32, #tpu.memory_space<vmem>>, %arg4: memref<1x8x128xf32, #tpu.memory_space<vmem>>, %arg5: memref<8x128xf32, #tpu.memory_space<vmem>>) attributes {dimension_semantics = [#tpu.dimension_semantics<parallel>, #tpu.dimension_semantics<arbitrary>], iteration_bounds = array<i64: 1, 1>, scalar_prefetch = 0 : i64, scratch_operands = 1 : i64, tpu.core_type = #tpu.core_type<tc>, window_params = [{transform_indices = @transform_0, window_bounds = array<i64: 16, 128>}, {transform_indices = @transform_1, window_bounds = array<i64: 16, 128>}, {transform_indices = @transform_2, window_bounds = array<i64: 1, 8, 128>}]} {
    %c0_i32 = arith.constant 0 : i32
    %0 = arith.cmpi eq, %arg1, %c0_i32 : i32
    %1 = arith.extui %0 : i1 to i32
    %c0_i32_0 = arith.constant 0 : i32
    %2 = arith.cmpi ne, %1, %c0_i32_0 : i32
    scf.if %2 {
      %cst_10 = arith.constant 0.000000e+00 : f32
      %15 = vector.broadcast %cst_10 : f32 to vector<8x128xf32>
      %c0_11 = arith.constant 0 : index
      %c0_12 = arith.constant 0 : index
      %16 = vector.load %arg5[%c0_11, %c0_12] : memref<8x128xf32, #tpu.memory_space<vmem>>, vector<8x128xf32>
      tpu.vector_store %arg5[%c0_11, %c0_12], %15 {strides = array<i32>} : memref<8x128xf32, #tpu.memory_space<vmem>>, vector<8x128xf32>,
    } else {
    }
    %c0 = arith.constant 0 : index
    %c0_1 = arith.constant 0 : index
    %3 = vector.load %arg2[%c0, %c0_1] : memref<16x128xf32, #tpu.memory_space<vmem>>, vector<16x128xf32>
    %c0_2 = arith.constant 0 : index
    %c0_3 = arith.constant 0 : index
    %4 = vector.load %arg3[%c0_2, %c0_3] : memref<16x128xf32, #tpu.memory_space<vmem>>, vector<16x128xf32>
    %5 = arith.subf %3, %4 : vector<16x128xf32>
    %6 = math.absf %5 : vector<16x128xf32>
    %c0_4 = arith.constant 0 : index
    %c0_5 = arith.constant 0 : index
    %7 = vector.load %arg5[%c0_4, %c0_5] : memref<8x128xf32, #tpu.memory_space<vmem>>, vector<8x128xf32>
    %8 = vector.shape_cast %6 : vector<16x128xf32> to vector<2x8x128xf32>
    %cst = arith.constant dense<0.000000e+00> : vector<8x128xf32>
    %9 = vector.multi_reduction <add>, %8, %cst [0] : vector<2x8x128xf32> to vector<8x128xf32>
    %10 = arith.addf %7, %9 : vector<8x128xf32>
    %c0_6 = arith.constant 0 : index
    %c0_7 = arith.constant 0 : index
    %11 = vector.load %arg5[%c0_6, %c0_7] : memref<8x128xf32, #tpu.memory_space<vmem>>, vector<8x128xf32>
    tpu.vector_store %arg5[%c0_6, %c0_7], %10 {strides = array<i32>} : memref<8x128xf32, #tpu.memory_space<vmem>>, vector<8x128xf32>,
    %c0_i32_8 = arith.constant 0 : i32
    %12 = arith.cmpi eq, %arg1, %c0_i32_8 : i32
    %13 = arith.extui %12 : i1 to i32
    %c0_i32_9 = arith.constant 0 : i32
    %14 = arith.cmpi ne, %13, %c0_i32_9 : i32
    scf.if %14 {
      %c0_10 = arith.constant 0 : index
      %c0_11 = arith.constant 0 : index
      %15 = vector.load %arg5[%c0_10, %c0_11] : memref<8x128xf32, #tpu.memory_space<vmem>>, vector<8x128xf32>
      %cst_12 = arith.constant 4.8828125E-4 : f32
      %16 = vector.broadcast %cst_12 : f32 to vector<8x128xf32>
      %17 = arith.mulf %15, %16 : vector<8x128xf32>
      %c0_13 = arith.constant 0 : index
      %c0_14 = arith.constant 0 : index
      %c0_15 = arith.constant 0 : index
      %18 = vector.load %arg4[%c0_13, %c0_14, %c0_15] : memref<1x8x128xf32, #tpu.memory_space<vmem>>, vector<1x8x128xf32>
      %19 = vector.shape_cast %18 : vector<1x8x128xf32> to vector<8x128xf32>
      %20 = vector.shape_cast %17 : vector<8x128xf32> to vector<1x8x128xf32>
      tpu.vector_store %arg4[%c0_13, %c0_14, %c0_15], %20 {strides = array<i32>} : memref<1x8x128xf32, #tpu.memory_space<vmem>>, vector<1x8x128xf32>,
    } else {
    }
    return
  }
  func.func @transform_0(%arg0: i32, %arg1: i32) -> (i32, i32) {
    %c1_i32 = arith.constant 1 : i32
    %0 = arith.muli %arg0, %c1_i32 : i32
    %1 = arith.addi %0, %arg1 : i32
    %c0_i32 = arith.constant 0 : i32
    %2 = arith.minsi %1, %c0_i32 : i32
    %c0_i32_0 = arith.constant 0 : i32
    %c0_i32_1 = arith.constant 0 : i32
    return %2, %c0_i32_0 : i32, i32
  }
  func.func @transform_1(%arg0: i32, %arg1: i32) -> (i32, i32) {
    %c1_i32 = arith.constant 1 : i32
    %0 = arith.muli %arg0, %c1_i32 : i32
    %1 = arith.addi %0, %arg1 : i32
    %c0_i32 = arith.constant 0 : i32
    %2 = arith.minsi %1, %c0_i32 : i32
    %c0_i32_0 = arith.constant 0 : i32
    %c0_i32_1 = arith.constant 0 : i32
    return %2, %c0_i32_0 : i32, i32
  }
  func.func @transform_2(%arg0: i32, %arg1: i32) -> (i32, i32, i32) {
    %c0_i32 = arith.constant 0 : i32
    %c0_i32_0 = arith.constant 0 : i32
    %c0_i32_1 = arith.constant 0 : i32
    return %arg0, %c0_i32, %c0_i32_0 : i32, i32, i32
  }
}

</mosaic_0001>

<llo_original>
// kernel: tpu_custom_call.1
$region0: #{tpu_custom_call.1}
  #allocation0 [shape = 'u32[]', space=smem, size = 0x4, offset = 0x4, fixed_abs, tag = 'smem constant byte address 0x4 - core index']
  #allocation1 [shape = 'u32[144,128]{1,0:T(1,128)}', space=vmem, size = 0x12000, scoped, tag = 'internal scratch']
  #allocation2 [shape = 'f32[8,128]{1,0:T(8,128)}', space=vmem, size = 0x1000, scoped, tag = 'scratch operand']
  %s0 = inlined_call_operand.hbm [shape: f32[16,128], index: 0, kind: input, shape index: {}]
  %s1 = inlined_call_operand.hbm [shape: f32[16,128], index: 1, kind: input, shape index: {}]
  %s2 = inlined_call_operand.hbm [shape: f32[1,8,128], index: 2, kind: output, shape index: {}]
  %s3 = sld [smem:[#allocation0]]
  $region34: #{tpu_custom_call.1} parent=0
    _
  %s5 = ssub.s32 1, %s3
  %s6 = scalar_select 0, %s5, %s3
  $region1: #{tpu_custom_call.1} parent=0
    #allocation3 [shape = 'u8[8192]{0}', space=vmem, size = 0x2000, scoped, tag = 'input window, operand 0, single buffered']
    #allocation4 [shape = 's32[1]{0}', space=sflag, size = 0x4, scoped, tag = 'scoped memory for tpu_custom_call.1']
    #allocation5 [shape = 's32[1]{0}', space=sflag, size = 0x4, scoped, tag = 'scoped memory for tpu_custom_call.1']
    #allocation6 [shape = 'u8[8192]{0}', space=vmem, size = 0x2000, scoped, tag = 'input window, operand 1, single buffered']
    #allocation7 [shape = 's32[1]{0}', space=sflag, size = 0x4, scoped, tag = 'scoped memory for tpu_custom_call.1']
    #allocation8 [shape = 'u8[4096]{0}', space=vmem, size = 0x1000, scoped, tag = 'output window, operand 0, single buffered']
    %7 = vsyncpa [#allocation4], 0
    %8 = vsyncpa [#allocation7], 0
    %9 = vsyncpa [#allocation5], 0
    // Predicated region
    $region2: #{tpu_custom_call.1} parent=1 // pred_check
      _
    $region3: #{tpu_custom_call.1} parent=1 // pred_check_branch
      %11 = sbr.rel (0) target = $region5
    $region4: #{tpu_custom_call.1} parent=1 // pred_region
      %s12 = sadd.s32 0, 0
      %p13 = scmp.lt.s32.totalorder %s12, 0
      %s14 = scalar_select %p13, %s12, 0
      %s15 = smul.u32 2, %s14
      %s17 = ssub.s32 256, 256
      %18 = vsyncadd [#allocation4], %s17
      %s19 = smul.addr %s15, 128
      %s20 = scalar_lea.hbm %s0, %s19
      %s21 = sshll.u32 [#allocation3], 4
      %s22 = int_to_ptr.vmem [resolvable:$true] %s21
      %27 = dma.hbm_to_vmem [thread:$0]  %s20, 256, %s22, [#allocation4], 128, 128, 8
    $region5: #{tpu_custom_call.1} parent=1 // pred_fallthru
      _
    // Predicated region
    $region6: #{tpu_custom_call.1} parent=1 // pred_check
      _
    $region7: #{tpu_custom_call.1} parent=1 // pred_check_branch
      %29 = sbr.rel (0) target = $region9
    $region8: #{tpu_custom_call.1} parent=1 // pred_region
      %s30 = sadd.s32 0, 0
      %p31 = scmp.lt.s32.totalorder %s30, 0
      %s32 = scalar_select %p31, %s30, 0
      %s33 = smul.u32 2, %s32
      %s35 = ssub.s32 256, 256
      %36 = vsyncadd [#allocation7], %s35
      %s37 = smul.addr %s33, 128
      %s38 = scalar_lea.hbm %s1, %s37
      %s39 = sshll.u32 [#allocation6], 4
      %s40 = int_to_ptr.vmem [resolvable:$true] %s39
      %45 = dma.hbm_to_vmem [thread:$0]  %s38, 256, %s40, [#allocation7], 128, 128, 8
    $region9: #{tpu_custom_call.1} parent=1 // pred_fallthru
      _
    // Predicated region
    $region10: #{tpu_custom_call.1} parent=1 // pred_check
      _
    $region11: #{tpu_custom_call.1} parent=1 // pred_check_branch
      %47 = sbr.rel (0) target = $region13
    $region12: #{tpu_custom_call.1} parent=1 // pred_region
      %48 = dma.done [#allocation4], 256
    $region13: #{tpu_custom_call.1} parent=1 // pred_fallthru
      _
    // Predicated region
    $region14: #{tpu_custom_call.1} parent=1 // pred_check
      _
    $region15: #{tpu_custom_call.1} parent=1 // pred_check_branch
      %50 = sbr.rel (0) target = $region17
    $region16: #{tpu_custom_call.1} parent=1 // pred_region
      %51 = dma.done [#allocation7], 256
    $region17: #{tpu_custom_call.1} parent=1 // pred_fallthru
      _
    %s52 = sadd.s32 0, 0
    %p53 = scmp.lt.s32.totalorder %s52, 0
    %s54 = scalar_select %p53, %s52, 0
    %s55 = smul.u32 2, %s54
    %s56 = sadd.s32 0, 0
    %p57 = scmp.lt.s32.totalorder %s56, 0
    %s58 = scalar_select %p57, %s56, 0
    %s59 = smul.u32 2, %s58
    %p60 = scmp.eq.s32.totalorder 0, 0
    // Predicated region
    $region18: #{tpu_custom_call.1} parent=1 // pred_check
      %p61 = pneg %p60
    $region19: #{tpu_custom_call.1} parent=1 // pred_check_branch
      %63 = sbr.rel (%p61) target = $region21
    $region20: #{tpu_custom_call.1} parent=1 // pred_region
      %64 = vst [vmem:[#allocation2] sm:$0xff] 0.0
    $region21: #{tpu_custom_call.1} parent=1 // pred_fallthru
      _
    %v65 = vld [vmem:[#allocation3] sm:$0xff]
    %v66 = vld [vmem:[#allocation3 + $0x8] sm:$0xff]
    %v67 = vld [vmem:[#allocation6] sm:$0xff]
    %v68 = vld [vmem:[#allocation6 + $0x8] sm:$0xff]
    %v69 = vsub.f32 %v65, %v67
    %v70 = vsub.f32 %v66, %v68
    %v71 = vand.u32 2147483647, %v69
    %v72 = vand.u32 2147483647, %v70
    %v73 = vld [vmem:[#allocation2] sm:$0xff]
    %v74 = vadd.f32 %v71, %v72
    %v75 = vadd.f32 %v73, %v74
    %76 = vst [vmem:[#allocation2] sm:$0xff] %v75
    // Predicated region
    $region22: #{tpu_custom_call.1} parent=1 // pred_check
      %p77 = pneg %p60
    $region23: #{tpu_custom_call.1} parent=1 // pred_check_branch
      %79 = sbr.rel (%p77) target = $region25
    $region24: #{tpu_custom_call.1} parent=1 // pred_region
      %v80 = vld [vmem:[#allocation2] sm:$0xff]
      %v81 = vmul.f32 %v80, 0.00048828125
      %82 = vst [vmem:[#allocation8] sm:$0xff] %v81
    $region25: #{tpu_custom_call.1} parent=1 // pred_fallthru
      _
    // Predicated region
    $region26: #{tpu_custom_call.1} parent=1 // pred_check
      _
    $region27: #{tpu_custom_call.1} parent=1 // pred_check_branch
      %84 = sbr.rel (0) target = $region29
    $region28: #{tpu_custom_call.1} parent=1 // pred_region
      %s86 = ssub.s32 128, 128
      %87 = vsyncadd [#allocation5], %s86
      %s89 = sshll.u32 [#allocation8], 4
      %s90 = int_to_ptr.vmem [resolvable:$true] %s89
      %92 = dma.vmem_to_hbm [thread:$0]  %s90, 128, %s2, [#allocation5]
    $region29: #{tpu_custom_call.1} parent=1 // pred_fallthru
      _
    // Predicated region
    $region30: #{tpu_custom_call.1} parent=1 // pred_check
      _
    $region31: #{tpu_custom_call.1} parent=1 // pred_check_branch
      %94 = sbr.rel (0) target = $region33
    $region32: #{tpu_custom_call.1} parent=1 // pred_region
      %95 = dma.done [#allocation5], 128
    $region33: #{tpu_custom_call.1} parent=1 // pred_fallthru
      _
    %96 = vsyncpa [#allocation4], 1
    %97 = vsyncpa [#allocation7], 1
    %98 = vsyncpa [#allocation5], 1

</llo_original>
